<compile_context>
chip_gen: v6e
topology: v6e:2x2x1
jax: 0.10.0
libtpu: 0.0.40
codegen_flags: <defaults>
</compile_context>

<pallas_src>
import jax
import jax.numpy as jnp
import numpy as np
from jax.experimental import pallas as pl
from jax.experimental.pallas import tpu as pltpu

# ---- problem sizes -----------------------------------------------------------
N = 2              # batch
CIN = 4            # input channels
H = W = 8          # spatial size
COUT = 8           # backbone conv output channels
KH = KW = 3        # conv kernel (stride 1, padding 1 -> "same")
IN_FEAT = CIN * H * W        # 256  (NCHW flatten of the input: (cin, h, w))
FEAT = COUT * H * W          # 512  (torch .view(N,-1) order: (cout, h, w))
NUM_CLASSES = 64             # nn.Linear(512, 64)


# ---- fused kernel ------------------------------------------------------------
def fused_kernel(x_ref, wconv_ref, bconv_ref, wfc_ref, bfc_ref, o_ref):
    """conv3x3(pad=1) + bias + ReLU + flatten + fc for the whole batch.

    x_ref:     (N, IN_FEAT)        raw NCHW-flattened input
    wconv_ref: (IN_FEAT, FEAT)     dense conv-as-matmul weight (taps + zero pad folded in)
    bconv_ref: (1, FEAT)           conv bias broadcast over (h, w)
    wfc_ref:   (FEAT, NUM_CLASSES) fc weight (already in torch flatten order)
    bfc_ref:   (1, NUM_CLASSES)
    o_ref:     (N, NUM_CLASSES)    logits
    """
    feat = jnp.maximum(
        jnp.dot(x_ref[...], wconv_ref[...], preferred_element_type=jnp.float32)
        + bconv_ref[...],
        0.0)                                                    # (N, FEAT), stays in vregs
    o_ref[...] = (jnp.dot(feat, wfc_ref[...], preferred_element_type=jnp.float32)
                  + bfc_ref[...])                               # (N, NUM_CLASSES)


# ---- one-time weight glue (hoisted out of the per-call path) ------------------
def _build_constants(conv_w, conv_b, fc_w, fc_b):
    conv_w = np.asarray(conv_w, np.float32)   # (COUT, CIN, KH, KW)
    conv_b = np.asarray(conv_b, np.float32)   # (COUT,)
    fc_w = np.asarray(fc_w, np.float32)       # (NUM_CLASSES, FEAT)
    fc_b = np.asarray(fc_b, np.float32)       # (NUM_CLASSES,)

    # Dense conv-as-matmul weight with zero padding folded in:
    #   out[n, cout*H*W + ho*W + wo] =
    #     sum_{cin,hi,wi} x[n, cin*H*W + hi*W + wi] * conv_w[cout, cin, hi-ho+1, wi-wo+1]
    wconv = np.zeros((CIN, H, W, COUT, H, W), np.float32)
    for kh in range(KH):
        for kw in range(KW):
            for ho in range(max(0, 1 - kh), min(H, H + 1 - kh)):
                hi = ho + kh - 1
                for wo in range(max(0, 1 - kw), min(W, W + 1 - kw)):
                    wi = wo + kw - 1
                    wconv[:, hi, wi, :, ho, wo] = conv_w[:, :, kh, kw].T   # (cin, cout)
    wconv = wconv.reshape(IN_FEAT, FEAT)

    bconv = np.repeat(conv_b, H * W).reshape(1, FEAT)        # bias per (cout, h, w)
    wfc = np.ascontiguousarray(fc_w.T)                       # (FEAT, NUM_CLASSES)
    bfc = fc_b.reshape(1, NUM_CLASSES)

    return (jnp.asarray(wconv), jnp.asarray(bconv),
            jnp.asarray(wfc), jnp.asarray(bfc))


def make_prototypical_forward(params):
    wconv, bconv, wfc, bfc = _build_constants(*params)

    vmem = lambda: pl.BlockSpec(memory_space=pltpu.MemorySpace.VMEM)
    fused = pl.pallas_call(
        fused_kernel,
        out_shape=jax.ShapeDtypeStruct((N, NUM_CLASSES), jnp.float32),
        in_specs=[vmem(), vmem(), vmem(), vmem(), vmem()],
        out_specs=vmem(),
    )

    @jax.jit
    def forward(x_nchw):
        # Contiguous NCHW flatten: metadata-only reshape, no pad/transpose glue.
        return fused(x_nchw.reshape(N, IN_FEAT), wconv, bconv, wfc, bfc)

    return forward


# ---- float64 numpy reference (host-side, precision-independent) ---------------
def _numpy_reference(x, conv_w, conv_b, fc_w, fc_b):
    x = np.asarray(x, np.float64)
    conv_w = np.asarray(conv_w, np.float64)
    conv_b = np.asarray(conv_b, np.float64)
    fc_w = np.asarray(fc_w, np.float64)
    fc_b = np.asarray(fc_b, np.float64)
    xp = np.pad(x, ((0, 0), (0, 0), (1, 1), (1, 1)))
    conv = np.zeros((N, COUT, H, W), np.float64)
    for kh in range(KH):
        for kw in range(KW):
            conv += np.einsum("nchw,oc->nohw",
                              xp[:, :, kh:kh + H, kw:kw + W],
                              conv_w[:, :, kh, kw])
    conv = np.maximum(conv + conv_b.reshape(1, COUT, 1, 1), 0.0)
    return conv.reshape(N, -1) @ fc_w.T + fc_b


# ---- main --------------------------------------------------------------------
if __name__ == "__main__":
    key = jax.random.PRNGKey(0)
    k_x, k_cw, k_cb, k_fw, k_fb = jax.random.split(key, 5)

    # deterministic synthetic parameters (PyTorch param shapes)
    conv_w = 0.1 * jax.random.normal(k_cw, (COUT, CIN, KH, KW), jnp.float32)
    conv_b = 0.1 * jax.random.normal(k_cb, (COUT,), jnp.float32)
    fc_w = 0.05 * jax.random.normal(k_fw, (NUM_CLASSES, FEAT), jnp.float32)
    fc_b = 0.05 * jax.random.normal(k_fb, (NUM_CLASSES,), jnp.float32)
    params = (conv_w, conv_b, fc_w, fc_b)

    x = jax.random.normal(k_x, (N, CIN, H, W), jnp.float32)   # NCHW input

    forward = make_prototypical_forward(params)
    out = jax.block_until_ready(forward(x))
    assert out.shape == (N, NUM_CLASSES) and out.dtype == jnp.float32

    ref = _numpy_reference(x, *params)
    np.testing.assert_allclose(np.asarray(out).astype(np.float64), ref,
                               rtol=1e-4, atol=1e-4)

    print("KERNEL_OK")
</pallas_src>

<mosaic_0001>
module attributes {stable_mosaic.version = 11 : i64} {
  func.func @fused_kernel(%arg0: memref<2x256xf32, #tpu.memory_space<vmem>>, %arg1: memref<256x512xf32, #tpu.memory_space<vmem>>, %arg2: memref<1x512xf32, #tpu.memory_space<vmem>>, %arg3: memref<512x64xf32, #tpu.memory_space<vmem>>, %arg4: memref<1x64xf32, #tpu.memory_space<vmem>>, %arg5: memref<2x64xf32, #tpu.memory_space<vmem>>) attributes {dimension_semantics = [], scalar_prefetch = 0 : i64, scratch_operands = 0 : i64, tpu.core_type = #tpu.core_type<tc>} {
    %c0 = arith.constant 0 : index
    %c0_0 = arith.constant 0 : index
    %0 = vector.load %arg0[%c0, %c0_0] : memref<2x256xf32, #tpu.memory_space<vmem>>, vector<2x256xf32>
    %c0_1 = arith.constant 0 : index
    %c0_2 = arith.constant 0 : index
    %1 = vector.load %arg1[%c0_1, %c0_2] : memref<256x512xf32, #tpu.memory_space<vmem>>, vector<256x512xf32>
    %cst = arith.constant dense<0.000000e+00> : vector<2x512xf32>
    %2 = tpu.matmul %0, %1, %cst {dimension_numbers = #tpu.dot_dimension_numbers<[1], [0], [0], [1], [0, 0, 1, 1], [], []>} : vector<2x256xf32>, vector<256x512xf32>, vector<2x512xf32> -> vector<2x512xf32>
    %c0_3 = arith.constant 0 : index
    %c0_4 = arith.constant 0 : index
    %3 = vector.load %arg2[%c0_3, %c0_4] : memref<1x512xf32, #tpu.memory_space<vmem>>, vector<1x512xf32>
    %4 = vector.broadcast %3 : vector<1x512xf32> to vector<2x512xf32>
    %5 = arith.addf %2, %4 : vector<2x512xf32>
    %cst_5 = arith.constant 0.000000e+00 : f32
    %6 = vector.broadcast %cst_5 : f32 to vector<2x512xf32>
    %7 = arith.maximumf %5, %6 : vector<2x512xf32>
    %c0_6 = arith.constant 0 : index
    %c0_7 = arith.constant 0 : index
    %8 = vector.load %arg3[%c0_6, %c0_7] : memref<512x64xf32, #tpu.memory_space<vmem>>, vector<512x64xf32>
    %cst_8 = arith.constant dense<0.000000e+00> : vector<2x64xf32>
    %9 = tpu.matmul %7, %8, %cst_8 {dimension_numbers = #tpu.dot_dimension_numbers<[1], [0], [0], [1], [0, 0, 1, 1], [], []>} : vector<2x512xf32>, vector<512x64xf32>, vector<2x64xf32> -> vector<2x64xf32>
    %c0_9 = arith.constant 0 : index
    %c0_10 = arith.constant 0 : index
    %10 = vector.load %arg4[%c0_9, %c0_10] : memref<1x64xf32, #tpu.memory_space<vmem>>, vector<1x64xf32>
    %11 = vector.broadcast %10 : vector<1x64xf32> to vector<2x64xf32>
    %12 = arith.addf %9, %11 : vector<2x64xf32>
    %c0_11 = arith.constant 0 : index
    %c0_12 = arith.constant 0 : index
    %13 = vector.load %arg5[%c0_11, %c0_12] : memref<2x64xf32, #tpu.memory_space<vmem>>, vector<2x64xf32>
    tpu.vector_store %arg5[%c0_11, %c0_12], %12 {strides = array<i32>} : memref<2x64xf32, #tpu.memory_space<vmem>>, vector<2x64xf32>,
    return
  }
}

</mosaic_0001>

<llo_original>
// kernel: forward.1
$region0: #{forward.1}
  #allocation0 [shape = 'u32[]', space=smem, size = 0x4, offset = 0x4, fixed_abs, tag = 'smem constant byte address 0x4 - core index']
  #allocation1 [shape = 'u32[144,128]{1,0:T(1,128)}', space=vmem, size = 0x12000, scoped, tag = 'internal scratch']
  %s0 = inlined_call_operand.vmem [shape: f32[2,256], index: 0, kind: input, shape index: {}]
  %s1 = inlined_call_operand.hbm [shape: f32[256,512], index: 1, kind: input, shape index: {}]
  %s2 = inlined_call_operand.vmem [shape: f32[1,512], index: 2, kind: input, shape index: {}]
  %s3 = inlined_call_operand.hbm [shape: f32[512,64], index: 3, kind: input, shape index: {}]
  %s4 = inlined_call_operand.vmem [shape: f32[1,64], index: 4, kind: input, shape index: {}]
  %s5 = inlined_call_operand.hbm [shape: f32[2,64], index: 5, kind: output, shape index: {}]
  %s6 = sld [smem:[#allocation0]]
  $region38: #{forward.1} parent=0
    _
  %s8 = ssub.s32 1, %s6
  %s9 = scalar_select 0, %s8, %s6
  $region1: #{forward.1} parent=0
    #allocation2 [shape = 'u8[524288]{0}', space=vmem, size = 0x80000, scoped, tag = 'input window, operand 1, single buffered']
    #allocation3 [shape = 's32[1]{0}', space=sflag, size = 0x4, scoped, tag = 'scoped memory for forward.1']
    #allocation4 [shape = 's32[1]{0}', space=sflag, size = 0x4, scoped, tag = 'scoped memory for forward.1']
    #allocation5 [shape = 'u8[262144]{0}', space=vmem, size = 0x40000, scoped, tag = 'input window, operand 3, single buffered']
    #allocation6 [shape = 's32[1]{0}', space=sflag, size = 0x4, scoped, tag = 'scoped memory for forward.1']
    #allocation7 [shape = 'u8[1024]{0}', space=vmem, size = 0x400, scoped, tag = 'output window, operand 0, single buffered']
    %10 = vsyncpa [#allocation3], 0
    %11 = vsyncpa [#allocation6], 0
    %12 = vsyncpa [#allocation4], 0
    // Predicated region
    $region2: #{forward.1} parent=1 // pred_check
      _
    $region3: #{forward.1} parent=1 // pred_check_branch
      %14 = sbr.rel (0) target = $region5
    $region4: #{forward.1} parent=1 // pred_region
      _
    $region5: #{forward.1} parent=1 // pred_fallthru
      _
    // Predicated region
    $region6: #{forward.1} parent=1 // pred_check
      _
    $region7: #{forward.1} parent=1 // pred_check_branch
      %16 = sbr.rel (0) target = $region9
    $region8: #{forward.1} parent=1 // pred_region
      %s18 = ssub.s32 16384, 16384
      %19 = vsyncadd [#allocation3], %s18
      %s20 = sshll.u32 [#allocation2], 4
      %s21 = int_to_ptr.vmem [resolvable:$true] %s20
      %26 = dma.hbm_to_vmem [thread:$0]  %s1, 16384, %s21, [#allocation3], 512, 512, 32
    $region9: #{forward.1} parent=1 // pred_fallthru
      _
    // Predicated region
    $region10: #{forward.1} parent=1 // pred_check
      _
    $region11: #{forward.1} parent=1 // pred_check_branch
      %28 = sbr.rel (0) target = $region13
    $region12: #{forward.1} parent=1 // pred_region
      _
    $region13: #{forward.1} parent=1 // pred_fallthru
      _
    // Predicated region
    $region14: #{forward.1} parent=1 // pred_check
      _
    $region15: #{forward.1} parent=1 // pred_check_branch
      %30 = sbr.rel (0) target = $region17
    $region16: #{forward.1} parent=1 // pred_region
      %s32 = ssub.s32 8192, 8192
      %33 = vsyncadd [#allocation6], %s32
      %s34 = sshll.u32 [#allocation5], 4
      %s35 = int_to_ptr.vmem [resolvable:$true] %s34
      %40 = dma.hbm_to_vmem [thread:$0]  %s3, 8192, %s35, [#allocation6], 128, 128, 8
    $region17: #{forward.1} parent=1 // pred_fallthru
      _
    // Predicated region
    $region18: #{forward.1} parent=1 // pred_check
      _
    $region19: #{forward.1} parent=1 // pred_check_branch
      %42 = sbr.rel (0) target = $region21
    $region20: #{forward.1} parent=1 // pred_region
      _
    $region21: #{forward.1} parent=1 // pred_fallthru
      _
    // Predicated region
    $region22: #{forward.1} parent=1 // pred_check
      _
    $region23: #{forward.1} parent=1 // pred_check_branch
      %44 = sbr.rel (0) target = $region25
    $region24: #{forward.1} parent=1 // pred_region
      %45 = dma.done [#allocation3], 16384
    $region25: #{forward.1} parent=1 // pred_fallthru
      _
    // Predicated region
    $region26: #{forward.1} parent=1 // pred_check
      _
    $region27: #{forward.1} parent=1 // pred_check_branch
      %47 = sbr.rel (0) target = $region29
    $region28: #{forward.1} parent=1 // pred_region
      %48 = dma.done [#allocation6], 8192
    $region29: #{forward.1} parent=1 // pred_fallthru
      _
    %v49 = vld [vmem:[%s0] sm:$0xf]
    %v50 = vld [vmem:[#allocation2] sm:$0xff]
    %v51 = vld [vmem:[#allocation2 + $0x8] sm:$0xff]
    %v52 = vld [vmem:[#allocation2 + $0x10] sm:$0xff]
    %v53 = vld [vmem:[#allocation2 + $0x18] sm:$0xff]
    %v54 = vld [vmem:[#allocation2 + $0x20] sm:$0xff]
    %v55 = vld [vmem:[#allocation2 + $0x28] sm:$0xff]
    %v56 = vld [vmem:[#allocation2 + $0x30] sm:$0xff]
    %v57 = vld [vmem:[#allocation2 + $0x38] sm:$0xff]
    %v58 = vld [vmem:[#allocation2 + $0x40] sm:$0xff]
    %v59 = vld [vmem:[#allocation2 + $0x48] sm:$0xff]
    %v60 = vld [vmem:[#allocation2 + $0x50] sm:$0xff]
    %v61 = vld [vmem:[#allocation2 + $0x58] sm:$0xff]
    %v62 = vld [vmem:[#allocation2 + $0x60] sm:$0xff]
    %v63 = vld [vmem:[#allocation2 + $0x68] sm:$0xff]
    %v64 = vld [vmem:[#allocation2 + $0x70] sm:$0xff]
    %v65 = vld [vmem:[#allocation2 + $0x78] sm:$0xff]
    %v66 = vld [vmem:[#allocation2 + $0x80] sm:$0xff]
    %v67 = vld [vmem:[#allocation2 + $0x88] sm:$0xff]
    %v68 = vld [vmem:[#allocation2 + $0x90] sm:$0xff]
    %v69 = vld [vmem:[#allocation2 + $0x98] sm:$0xff]
    %v70 = vld [vmem:[#allocation2 + $0xa0] sm:$0xff]
    %v71 = vld [vmem:[#allocation2 + $0xa8] sm:$0xff]
    %v72 = vld [vmem:[#allocation2 + $0xb0] sm:$0xff]
    %v73 = vld [vmem:[#allocation2 + $0xb8] sm:$0xff]
    %v74 = vld [vmem:[#allocation2 + $0xc0] sm:$0xff]
    %v75 = vld [vmem:[#allocation2 + $0xc8] sm:$0xff]
    %v76 = vld [vmem:[#allocation2 + $0xd0] sm:$0xff]
    %v77 = vld [vmem:[#allocation2 + $0xd8] sm:$0xff]
    %v78 = vld [vmem:[#allocation2 + $0xe0] sm:$0xff]
    %v79 = vld [vmem:[#allocation2 + $0xe8] sm:$0xff]
    %v80 = vld [vmem:[#allocation2 + $0xf0] sm:$0xff]
    %v81 = vld [vmem:[#allocation2 + $0xf8] sm:$0xff]
    %v82 = vld [vmem:[#allocation2 + $0x100] sm:$0xff]
    %v83 = vld [vmem:[#allocation2 + $0x108] sm:$0xff]
    %v84 = vld [vmem:[#allocation2 + $0x110] sm:$0xff]
    %v85 = vld [vmem:[#allocation2 + $0x118] sm:$0xff]
    %v86 = vld [vmem:[#allocation2 + $0x120] sm:$0xff]
    %v87 = vld [vmem:[#allocation2 + $0x128] sm:$0xff]
    %v88 = vld [vmem:[#allocation2 + $0x130] sm:$0xff]
    %v89 = vld [vmem:[#allocation2 + $0x138] sm:$0xff]
    %v90 = vld [vmem:[#allocation2 + $0x140] sm:$0xff]
    %v91 = vld [vmem:[#allocation2 + $0x148] sm:$0xff]
    %v92 = vld [vmem:[#allocation2 + $0x150] sm:$0xff]
    %v93 = vld [vmem:[#allocation2 + $0x158] sm:$0xff]
    %v94 = vld [vmem:[#allocation2 + $0x160] sm:$0xff]
    %v95 = vld [vmem:[#allocation2 + $0x168] sm:$0xff]
    %v96 = vld [vmem:[#allocation2 + $0x170] sm:$0xff]
    %v97 = vld [vmem:[#allocation2 + $0x178] sm:$0xff]
    %v98 = vld [vmem:[#allocation2 + $0x180] sm:$0xff]
    %v99 = vld [vmem:[#allocation2 + $0x188] sm:$0xff]
    %v100 = vld [vmem:[#allocation2 + $0x190] sm:$0xff]
    %v101 = vld [vmem:[#allocation2 + $0x198] sm:$0xff]
    %v102 = vld [vmem:[#allocation2 + $0x1a0] sm:$0xff]
    %v103 = vld [vmem:[#allocation2 + $0x1a8] sm:$0xff]
    %v104 = vld [vmem:[#allocation2 + $0x1b0] sm:$0xff]
    %v105 = vld [vmem:[#allocation2 + $0x1b8] sm:$0xff]
    %v106 = vld [vmem:[#allocation2 + $0x1c0] sm:$0xff]
    %v107 = vld [vmem:[#allocation2 + $0x1c8] sm:$0xff]
    %v108 = vld [vmem:[#allocation2 + $0x1d0] sm:$0xff]
    %v109 = vld [vmem:[#allocation2 + $0x1d8] sm:$0xff]
    %v110 = vld [vmem:[#allocation2 + $0x1e0] sm:$0xff]
    %v111 = vld [vmem:[#allocation2 + $0x1e8] sm:$0xff]
    %v112 = vld [vmem:[#allocation2 + $0x1f0] sm:$0xff]
    %v113 = vld [vmem:[#allocation2 + $0x1f8] sm:$0xff]
    %v114 = vld [vmem:[#allocation2 + $0x200] sm:$0xff]
    %v115 = vld [vmem:[#allocation2 + $0x208] sm:$0xff]
    %v116 = vld [vmem:[#allocation2 + $0x210] sm:$0xff]
    %v117 = vld [vmem:[#allocation2 + $0x218] sm:$0xff]
    %v118 = vld [vmem:[#allocation2 + $0x220] sm:$0xff]
    %v119 = vld [vmem:[#allocation2 + $0x228] sm:$0xff]
    %v120 = vld [vmem:[#allocation2 + $0x230] sm:$0xff]
    %v121 = vld [vmem:[#allocation2 + $0x238] sm:$0xff]
    %v122 = vld [vmem:[#allocation2 + $0x240] sm:$0xff]
    %v123 = vld [vmem:[#allocation2 + $0x248] sm:$0xff]
    %v124 = vld [vmem:[#allocation2 + $0x250] sm:$0xff]
    %v125 = vld [vmem:[#allocation2 + $0x258] sm:$0xff]
    %v126 = vld [vmem:[#allocation2 + $0x260] sm:$0xff]
    %v127 = vld [vmem:[#allocation2 + $0x268] sm:$0xff]
    %v128 = vld [vmem:[#allocation2 + $0x270] sm:$0xff]
    %v129 = vld [vmem:[#allocation2 + $0x278] sm:$0xff]
    %v130 = vld [vmem:[#allocation2 + $0x280] sm:$0xff]
    %v131 = vld [vmem:[#allocation2 + $0x288] sm:$0xff]
    %v132 = vld [vmem:[#allocation2 + $0x290] sm:$0xff]
    %v133 = vld [vmem:[#allocation2 + $0x298] sm:$0xff]
    %v134 = vld [vmem:[#allocation2 + $0x2a0] sm:$0xff]
    %v135 = vld [vmem:[#allocation2 + $0x2a8] sm:$0xff]
    %v136 = vld [vmem:[#allocation2 + $0x2b0] sm:$0xff]
    %v137 = vld [vmem:[#allocation2 + $0x2b8] sm:$0xff]
    %v138 = vld [vmem:[#allocation2 + $0x2c0] sm:$0xff]
    %v139 = vld [vmem:[#allocation2 + $0x2c8] sm:$0xff]
    %v140 = vld [vmem:[#allocation2 + $0x2d0] sm:$0xff]
    %v141 = vld [vmem:[#allocation2 + $0x2d8] sm:$0xff]
    %v142 = vld [vmem:[#allocation2 + $0x2e0] sm:$0xff]
    %v143 = vld [vmem:[#allocation2 + $0x2e8] sm:$0xff]
    %v144 = vld [vmem:[#allocation2 + $0x2f0] sm:$0xff]
    %v145 = vld [vmem:[#allocation2 + $0x2f8] sm:$0xff]
    %v146 = vld [vmem:[#allocation2 + $0x300] sm:$0xff]
    %v147 = vld [vmem:[#allocation2 + $0x308] sm:$0xff]
    %v148 = vld [vmem:[#allocation2 + $0x310] sm:$0xff]
    %v149 = vld [vmem:[#allocation2 + $0x318] sm:$0xff]
    %v150 = vld [vmem:[#allocation2 + $0x320] sm:$0xff]
    %v151 = vld [vmem:[#allocation2 + $0x328] sm:$0xff]
    %v152 = vld [vmem:[#allocation2 + $0x330] sm:$0xff]
    %v153 = vld [vmem:[#allocation2 + $0x338] sm:$0xff]
    %v154 = vld [vmem:[#allocation2 + $0x340] sm:$0xff]
    %v155 = vld [vmem:[#allocation2 + $0x348] sm:$0xff]
    %v156 = vld [vmem:[#allocation2 + $0x350] sm:$0xff]
    %v157 = vld [vmem:[#allocation2 + $0x358] sm:$0xff]
    %v158 = vld [vmem:[#allocation2 + $0x360] sm:$0xff]
    %v159 = vld [vmem:[#allocation2 + $0x368] sm:$0xff]
    %v160 = vld [vmem:[#allocation2 + $0x370] sm:$0xff]
    %v161 = vld [vmem:[#allocation2 + $0x378] sm:$0xff]
    %v162 = vld [vmem:[#allocation2 + $0x380] sm:$0xff]
    %v163 = vld [vmem:[#allocation2 + $0x388] sm:$0xff]
    %v164 = vld [vmem:[#allocation2 + $0x390] sm:$0xff]
    %v165 = vld [vmem:[#allocation2 + $0x398] sm:$0xff]
    %v166 = vld [vmem:[#allocation2 + $0x3a0] sm:$0xff]
    %v167 = vld [vmem:[#allocation2 + $0x3a8] sm:$0xff]
    %v168 = vld [vmem:[#allocation2 + $0x3b0] sm:$0xff]
    %v169 = vld [vmem:[#allocation2 + $0x3b8] sm:$0xff]
    %v170 = vld [vmem:[#allocation2 + $0x3c0] sm:$0xff]
    %v171 = vld [vmem:[#allocation2 + $0x3c8] sm:$0xff]
    %v172 = vld [vmem:[#allocation2 + $0x3d0] sm:$0xff]
    %v173 = vld [vmem:[#allocation2 + $0x3d8] sm:$0xff]
    %v174 = vld [vmem:[#allocation2 + $0x3e0] sm:$0xff]
    %v175 = vld [vmem:[#allocation2 + $0x3e8] sm:$0xff]
    %v176 = vld [vmem:[#allocation2 + $0x3f0] sm:$0xff]
    %v177 = vld [vmem:[#allocation2 + $0x3f8] sm:$0xff]
    %v178 = vld [vmem:[%s2] sm:$0xf]
    %v180 = vlaneseq
    %v181 = vshrl.u32 %v180, 7
    %v182 = vsub.s32 0, %v181
    %v183 = vrot.slane %v178, %v182
    %v184 = vlaneseq
    %v185 = vshrl.u32 %v184, 7
    %v186 = vsub.s32 1, %v185
    %v187 = vrot.slane %v178, %v186
    %v188 = vlaneseq
    %v189 = vshrl.u32 %v188, 7
    %v190 = vsub.s32 2, %v189
    %v191 = vrot.slane %v178, %v190
    %v192 = vlaneseq
    %v193 = vshrl.u32 %v192, 7
    %v194 = vsub.s32 3, %v193
    %v195 = vrot.slane %v178, %v194
    %v202 = vunpack.c.l.s4 1983009808
    %v203 = vunpack.c.0.s8 %v202
    %v204 = vlaneseq
    %v205 = vshrl.u32 %v204, 7
    %v206 = vsub.s32 %v203, %v205
    %v207 = vrot.slane %v49, %v206
    %v208 = vcombine.high %v207, %v207
    %211 = vmatprep.subr.mxu0 %v111
    %212 = vmatpush1.msra.mxu0 %v110
    %213 = vmatprep.subr.mxu0 %v107
    %214 = vmatpush1.msra.mxu0 %v106
    %215 = vmatprep.subr.mxu0 %v103
    %216 = vmatpush1.msra.mxu0 %v102
    %217 = vmatprep.subr.mxu0 %v99
    %218 = vmatpush1.msra.mxu0 %v98
    %219 = vmatprep.subr.mxu0 %v95
    %220 = vmatpush1.msra.mxu0 %v94
    %221 = vmatprep.subr.mxu0 %v91
    %222 = vmatpush1.msra.mxu0 %v90
    %223 = vmatprep.subr.mxu0 %v87
    %224 = vmatpush1.msra.mxu0 %v86
    %225 = vmatprep.subr.mxu0 %v83
    %226 = vmatpush1.msra.mxu0 %v82
    %227 = vmatprep.subr.mxu0 %v79
    %228 = vmatpush1.msra.mxu0 %v78
    %229 = vmatprep.subr.mxu0 %v75
    %230 = vmatpush1.msra.mxu0 %v74
    %231 = vmatprep.subr.mxu0 %v71
    %232 = vmatpush1.msra.mxu0 %v70
    %233 = vmatprep.subr.mxu0 %v67
    %234 = vmatpush1.msra.mxu0 %v66
    %235 = vmatprep.subr.mxu0 %v63
    %236 = vmatpush1.msra.mxu0 %v62
    %237 = vmatprep.subr.mxu0 %v59
    %238 = vmatpush1.msra.mxu0 %v58
    %239 = vmatprep.subr.mxu0 %v55
    %240 = vmatpush1.msra.mxu0 %v54
    %241 = vmatprep.subr.mxu0 %v51
    %242 = vmatpush1.msra.mxu0 %v50
    %243 = vmatprep.subr.mxu0 %v175
    %244 = vmatpush2.msra.mxu0 %v174
    %245 = vmatprep.subr.mxu0 %v171
    %246 = vmatpush2.msra.mxu0 %v170
    %247 = vmatprep.subr.mxu0 %v167
    %248 = vmatpush2.msra.mxu0 %v166
    %249 = vmatprep.subr.mxu0 %v163
    %250 = vmatpush2.msra.mxu0 %v162
    %251 = vmatprep.subr.mxu0 %v159
    %252 = vmatpush2.msra.mxu0 %v158
    %253 = vmatprep.subr.mxu0 %v155
    %254 = vmatpush2.msra.mxu0 %v154
    %255 = vmatprep.subr.mxu0 %v151
    %256 = vmatpush2.msra.mxu0 %v150
    %257 = vmatprep.subr.mxu0 %v147
    %258 = vmatpush2.msra.mxu0 %v146
    %259 = vmatprep.subr.mxu0 %v143
    %260 = vmatpush2.msra.mxu0 %v142
    %261 = vmatprep.subr.mxu0 %v139
    %262 = vmatpush2.msra.mxu0 %v138
    %263 = vmatprep.subr.mxu0 %v135
    %264 = vmatpush2.msra.mxu0 %v134
    %265 = vmatprep.subr.mxu0 %v131
    %266 = vmatpush2.msra.mxu0 %v130
    %267 = vmatprep.subr.mxu0 %v127
    %268 = vmatpush2.msra.mxu0 %v126
    %269 = vmatprep.subr.mxu0 %v123
    %270 = vmatpush2.msra.mxu0 %v122
    %271 = vmatprep.subr.mxu0 %v119
    %272 = vmatpush2.msra.mxu0 %v118
    %273 = vmatprep.subr.mxu0 %v115
    %274 = vmatpush2.msra.mxu0 %v114
    %275 = vmatprep.mubr.f32.mxu0 %v208
    %276 = vmatmul.mubr.f32.gmra.mxu0 %v207
    %v277 = vpop.f32.mrf.mxu0
    %v278 = vadd.f32 %v183, %v277
    %v279 = vpop.f32.mrf.mxu0
    %v280 = vadd.f32 %v187, %v279
    %281 = vdwg.mxu0
    %282 = vmatprep.subr.mxu0 %v113
    %283 = vmatpush1.msra.mxu0 %v112
    %284 = vmatprep.subr.mxu0 %v109
    %285 = vmatpush1.msra.mxu0 %v108
    %286 = vmatprep.subr.mxu0 %v105
    %287 = vmatpush1.msra.mxu0 %v104
    %288 = vmatprep.subr.mxu0 %v101
    %289 = vmatpush1.msra.mxu0 %v100
    %290 = vmatprep.subr.mxu0 %v97
    %291 = vmatpush1.msra.mxu0 %v96
    %292 = vmatprep.subr.mxu0 %v93
    %293 = vmatpush1.msra.mxu0 %v92
    %294 = vmatprep.subr.mxu0 %v89
    %295 = vmatpush1.msra.mxu0 %v88
    %296 = vmatprep.subr.mxu0 %v85
    %297 = vmatpush1.msra.mxu0 %v84
    %298 = vmatprep.subr.mxu0 %v81
    %299 = vmatpush1.msra.mxu0 %v80
    %300 = vmatprep.subr.mxu0 %v77
    %301 = vmatpush1.msra.mxu0 %v76
    %302 = vmatprep.subr.mxu0 %v73
    %303 = vmatpush1.msra.mxu0 %v72
    %304 = vmatprep.subr.mxu0 %v69
    %305 = vmatpush1.msra.mxu0 %v68
    %306 = vmatprep.subr.mxu0 %v65
    %307 = vmatpush1.msra.mxu0 %v64
    %308 = vmatprep.subr.mxu0 %v61
    %309 = vmatpush1.msra.mxu0 %v60
    %310 = vmatprep.subr.mxu0 %v57
    %311 = vmatpush1.msra.mxu0 %v56
    %312 = vmatprep.subr.mxu0 %v53
    %313 = vmatpush1.msra.mxu0 %v52
    %314 = vmatprep.subr.mxu0 %v177
    %315 = vmatpush2.msra.mxu0 %v176
    %316 = vmatprep.subr.mxu0 %v173
    %317 = vmatpush2.msra.mxu0 %v172
    %318 = vmatprep.subr.mxu0 %v169
    %319 = vmatpush2.msra.mxu0 %v168
    %320 = vmatprep.subr.mxu0 %v165
    %321 = vmatpush2.msra.mxu0 %v164
    %322 = vmatprep.subr.mxu0 %v161
    %323 = vmatpush2.msra.mxu0 %v160
    %324 = vmatprep.subr.mxu0 %v157
    %325 = vmatpush2.msra.mxu0 %v156
    %326 = vmatprep.subr.mxu0 %v153
    %327 = vmatpush2.msra.mxu0 %v152
    %328 = vmatprep.subr.mxu0 %v149
    %329 = vmatpush2.msra.mxu0 %v148
    %330 = vmatprep.subr.mxu0 %v145
    %331 = vmatpush2.msra.mxu0 %v144
    %332 = vmatprep.subr.mxu0 %v141
    %333 = vmatpush2.msra.mxu0 %v140
    %334 = vmatprep.subr.mxu0 %v137
    %335 = vmatpush2.msra.mxu0 %v136
    %336 = vmatprep.subr.mxu0 %v133
    %337 = vmatpush2.msra.mxu0 %v132
    %338 = vmatprep.subr.mxu0 %v129
    %339 = vmatpush2.msra.mxu0 %v128
    %340 = vmatprep.subr.mxu0 %v125
    %341 = vmatpush2.msra.mxu0 %v124
    %342 = vmatprep.subr.mxu0 %v121
    %343 = vmatpush2.msra.mxu0 %v120
    %344 = vmatprep.subr.mxu0 %v117
    %345 = vmatpush2.msra.mxu0 %v116
    %346 = vmatprep.mubr.f32.mxu0 %v208
    %347 = vmatmul.mubr.f32.gmra.mxu0 %v207
    %v348 = vpop.f32.mrf.mxu0
    %v349 = vadd.f32 %v191, %v348
    %v350 = vpop.f32.mrf.mxu0
    %v351 = vadd.f32 %v195, %v350
    %352 = vdwg.mxu0
    %v353 = vmax.f32 %v278, 0.0
    %v354 = vmax.f32 %v280, 0.0
    %v355 = vmax.f32 %v349, 0.0
    %v356 = vmax.f32 %v351, 0.0
    %v357 = vld [vmem:[#allocation5] sm:$0xff]
    %v358 = vld [vmem:[#allocation5 + $0x8] sm:$0xff]
    %v359 = vld [vmem:[#allocation5 + $0x10] sm:$0xff]
    %v360 = vld [vmem:[#allocation5 + $0x18] sm:$0xff]
    %v361 = vld [vmem:[#allocation5 + $0x20] sm:$0xff]
    %v362 = vld [vmem:[#allocation5 + $0x28] sm:$0xff]
    %v363 = vld [vmem:[#allocation5 + $0x30] sm:$0xff]
    %v364 = vld [vmem:[#allocation5 + $0x38] sm:$0xff]
    %v365 = vld [vmem:[#allocation5 + $0x40] sm:$0xff]
    %v366 = vld [vmem:[#allocation5 + $0x48] sm:$0xff]
    %v367 = vld [vmem:[#allocation5 + $0x50] sm:$0xff]
    %v368 = vld [vmem:[#allocation5 + $0x58] sm:$0xff]
    %v369 = vld [vmem:[#allocation5 + $0x60] sm:$0xff]
    %v370 = vld [vmem:[#allocation5 + $0x68] sm:$0xff]
    %v371 = vld [vmem:[#allocation5 + $0x70] sm:$0xff]
    %v372 = vld [vmem:[#allocation5 + $0x78] sm:$0xff]
    %v373 = vld [vmem:[#allocation5 + $0x80] sm:$0xff]
    %v374 = vld [vmem:[#allocation5 + $0x88] sm:$0xff]
    %v375 = vld [vmem:[#allocation5 + $0x90] sm:$0xff]
    %v376 = vld [vmem:[#allocation5 + $0x98] sm:$0xff]
    %v377 = vld [vmem:[#allocation5 + $0xa0] sm:$0xff]
    %v378 = vld [vmem:[#allocation5 + $0xa8] sm:$0xff]
    %v379 = vld [vmem:[#allocation5 + $0xb0] sm:$0xff]
    %v380 = vld [vmem:[#allocation5 + $0xb8] sm:$0xff]
    %v381 = vld [vmem:[#allocation5 + $0xc0] sm:$0xff]
    %v382 = vld [vmem:[#allocation5 + $0xc8] sm:$0xff]
    %v383 = vld [vmem:[#allocation5 + $0xd0] sm:$0xff]
    %v384 = vld [vmem:[#allocation5 + $0xd8] sm:$0xff]
    %v385 = vld [vmem:[#allocation5 + $0xe0] sm:$0xff]
    %v386 = vld [vmem:[#allocation5 + $0xe8] sm:$0xff]
    %v387 = vld [vmem:[#allocation5 + $0xf0] sm:$0xff]
    %v388 = vld [vmem:[#allocation5 + $0xf8] sm:$0xff]
    %v389 = vld [vmem:[#allocation5 + $0x100] sm:$0xff]
    %v390 = vld [vmem:[#allocation5 + $0x108] sm:$0xff]
    %v391 = vld [vmem:[#allocation5 + $0x110] sm:$0xff]
    %v392 = vld [vmem:[#allocation5 + $0x118] sm:$0xff]
    %v393 = vld [vmem:[#allocation5 + $0x120] sm:$0xff]
    %v394 = vld [vmem:[#allocation5 + $0x128] sm:$0xff]
    %v395 = vld [vmem:[#allocation5 + $0x130] sm:$0xff]
    %v396 = vld [vmem:[#allocation5 + $0x138] sm:$0xff]
    %v397 = vld [vmem:[#allocation5 + $0x140] sm:$0xff]
    %v398 = vld [vmem:[#allocation5 + $0x148] sm:$0xff]
    %v399 = vld [vmem:[#allocation5 + $0x150] sm:$0xff]
    %v400 = vld [vmem:[#allocation5 + $0x158] sm:$0xff]
    %v401 = vld [vmem:[#allocation5 + $0x160] sm:$0xff]
    %v402 = vld [vmem:[#allocation5 + $0x168] sm:$0xff]
    %v403 = vld [vmem:[#allocation5 + $0x170] sm:$0xff]
    %v404 = vld [vmem:[#allocation5 + $0x178] sm:$0xff]
    %v405 = vld [vmem:[#allocation5 + $0x180] sm:$0xff]
    %v406 = vld [vmem:[#allocation5 + $0x188] sm:$0xff]
    %v407 = vld [vmem:[#allocation5 + $0x190] sm:$0xff]
    %v408 = vld [vmem:[#allocation5 + $0x198] sm:$0xff]
    %v409 = vld [vmem:[#allocation5 + $0x1a0] sm:$0xff]
    %v410 = vld [vmem:[#allocation5 + $0x1a8] sm:$0xff]
    %v411 = vld [vmem:[#allocation5 + $0x1b0] sm:$0xff]
    %v412 = vld [vmem:[#allocation5 + $0x1b8] sm:$0xff]
    %v413 = vld [vmem:[#allocation5 + $0x1c0] sm:$0xff]
    %v414 = vld [vmem:[#allocation5 + $0x1c8] sm:$0xff]
    %v415 = vld [vmem:[#allocation5 + $0x1d0] sm:$0xff]
    %v416 = vld [vmem:[#allocation5 + $0x1d8] sm:$0xff]
    %v417 = vld [vmem:[#allocation5 + $0x1e0] sm:$0xff]
    %v418 = vld [vmem:[#allocation5 + $0x1e8] sm:$0xff]
    %v419 = vld [vmem:[#allocation5 + $0x1f0] sm:$0xff]
    %v420 = vld [vmem:[#allocation5 + $0x1f8] sm:$0xff]
    %v421 = vld [vmem:[%s4] sm:$0x1]
    %v423 = vlaneseq
    %v424 = vshrl.u32 %v423, 7
    %v425 = vsub.s32 0, %v424
    %v426 = vrot.slane %v421, %v425
    %428 = vmatprep.subr.mxu0 0.0
    %429 = vmatpush1.msra.mxu0 %v372
    %430 = vmatprep.subr.mxu0 0.0
    %431 = vmatpush1.msra.mxu0 %v371
    %432 = vmatprep.subr.mxu0 0.0
    %433 = vmatpush1.msra.mxu0 %v370
    %434 = vmatprep.subr.mxu0 0.0
    %435 = vmatpush1.msra.mxu0 %v369
    %436 = vmatprep.subr.mxu0 0.0
    %437 = vmatpush1.msra.mxu0 %v368
    %438 = vmatprep.subr.mxu0 0.0
    %439 = vmatpush1.msra.mxu0 %v367
    %440 = vmatprep.subr.mxu0 0.0
    %441 = vmatpush1.msra.mxu0 %v366
    %442 = vmatprep.subr.mxu0 0.0
    %443 = vmatpush1.msra.mxu0 %v365
    %444 = vmatprep.subr.mxu0 0.0
    %445 = vmatpush1.msra.mxu0 %v364
    %446 = vmatprep.subr.mxu0 0.0
    %447 = vmatpush1.msra.mxu0 %v363
    %448 = vmatprep.subr.mxu0 0.0
    %449 = vmatpush1.msra.mxu0 %v362
    %450 = vmatprep.subr.mxu0 0.0
    %451 = vmatpush1.msra.mxu0 %v361
    %452 = vmatprep.subr.mxu0 0.0
    %453 = vmatpush1.msra.mxu0 %v360
    %454 = vmatprep.subr.mxu0 0.0
    %455 = vmatpush1.msra.mxu0 %v359
    %456 = vmatprep.subr.mxu0 0.0
    %457 = vmatpush1.msra.mxu0 %v358
    %458 = vmatprep.subr.mxu0 0.0
    %459 = vmatpush1.msra.mxu0 %v357
    %460 = vmatprep.subr.mxu0 0.0
    %461 = vmatpush2.msra.mxu0 %v388
    %462 = vmatprep.subr.mxu0 0.0
    %463 = vmatpush2.msra.mxu0 %v387
    %464 = vmatprep.subr.mxu0 0.0
    %465 = vmatpush2.msra.mxu0 %v386
    %466 = vmatprep.subr.mxu0 0.0
    %467 = vmatpush2.msra.mxu0 %v385
    %468 = vmatprep.subr.mxu0 0.0
    %469 = vmatpush2.msra.mxu0 %v384
    %470 = vmatprep.subr.mxu0 0.0
    %471 = vmatpush2.msra.mxu0 %v383
    %472 = vmatprep.subr.mxu0 0.0
    %473 = vmatpush2.msra.mxu0 %v382
    %474 = vmatprep.subr.mxu0 0.0
    %475 = vmatpush2.msra.mxu0 %v381
    %476 = vmatprep.subr.mxu0 0.0
    %477 = vmatpush2.msra.mxu0 %v380
    %478 = vmatprep.subr.mxu0 0.0
    %479 = vmatpush2.msra.mxu0 %v379
    %480 = vmatprep.subr.mxu0 0.0
    %481 = vmatpush2.msra.mxu0 %v378
    %482 = vmatprep.subr.mxu0 0.0
    %483 = vmatpush2.msra.mxu0 %v377
    %484 = vmatprep.subr.mxu0 0.0
    %485 = vmatpush2.msra.mxu0 %v376
    %486 = vmatprep.subr.mxu0 0.0
    %487 = vmatpush2.msra.mxu0 %v375
    %488 = vmatprep.subr.mxu0 0.0
    %489 = vmatpush2.msra.mxu0 %v374
    %490 = vmatprep.subr.mxu0 0.0
    %491 = vmatpush2.msra.mxu0 %v373
    %492 = vmatprep.mubr.f32.mxu0 %v354
    %493 = vmatmul.mubr.f32.gmra.mxu0 %v353
    %v494 = vpop.f32.mrf.mxu0
    %v495 = vadd.f32 %v426, %v494
    %v496 = vpop.f32.mrf.mxu0
    %497 = vdwg.mxu0
    %498 = vmatprep.subr.mxu0 0.0
    %499 = vmatpush1.msra.mxu0 %v404
    %500 = vmatprep.subr.mxu0 0.0
    %501 = vmatpush1.msra.mxu0 %v403
    %502 = vmatprep.subr.mxu0 0.0
    %503 = vmatpush1.msra.mxu0 %v402
    %504 = vmatprep.subr.mxu0 0.0
    %505 = vmatpush1.msra.mxu0 %v401
    %506 = vmatprep.subr.mxu0 0.0
    %507 = vmatpush1.msra.mxu0 %v400
    %508 = vmatprep.subr.mxu0 0.0
    %509 = vmatpush1.msra.mxu0 %v399
    %510 = vmatprep.subr.mxu0 0.0
    %511 = vmatpush1.msra.mxu0 %v398
    %512 = vmatprep.subr.mxu0 0.0
    %513 = vmatpush1.msra.mxu0 %v397
    %514 = vmatprep.subr.mxu0 0.0
    %515 = vmatpush1.msra.mxu0 %v396
    %516 = vmatprep.subr.mxu0 0.0
    %517 = vmatpush1.msra.mxu0 %v395
    %518 = vmatprep.subr.mxu0 0.0
    %519 = vmatpush1.msra.mxu0 %v394
    %520 = vmatprep.subr.mxu0 0.0
    %521 = vmatpush1.msra.mxu0 %v393
    %522 = vmatprep.subr.mxu0 0.0
    %523 = vmatpush1.msra.mxu0 %v392
    %524 = vmatprep.subr.mxu0 0.0
    %525 = vmatpush1.msra.mxu0 %v391
    %526 = vmatprep.subr.mxu0 0.0
    %527 = vmatpush1.msra.mxu0 %v390
    %528 = vmatprep.subr.mxu0 0.0
    %529 = vmatpush1.msra.mxu0 %v389
    %530 = vmatprep.subr.mxu0 0.0
    %531 = vmatpush2.msra.mxu0 %v420
    %532 = vmatprep.subr.mxu0 0.0
    %533 = vmatpush2.msra.mxu0 %v419
    %534 = vmatprep.subr.mxu0 0.0
    %535 = vmatpush2.msra.mxu0 %v418
    %536 = vmatprep.subr.mxu0 0.0
    %537 = vmatpush2.msra.mxu0 %v417
    %538 = vmatprep.subr.mxu0 0.0
    %539 = vmatpush2.msra.mxu0 %v416
    %540 = vmatprep.subr.mxu0 0.0
    %541 = vmatpush2.msra.mxu0 %v415
    %542 = vmatprep.subr.mxu0 0.0
    %543 = vmatpush2.msra.mxu0 %v414
    %544 = vmatprep.subr.mxu0 0.0
    %545 = vmatpush2.msra.mxu0 %v413
    %546 = vmatprep.subr.mxu0 0.0
    %547 = vmatpush2.msra.mxu0 %v412
    %548 = vmatprep.subr.mxu0 0.0
    %549 = vmatpush2.msra.mxu0 %v411
    %550 = vmatprep.subr.mxu0 0.0
    %551 = vmatpush2.msra.mxu0 %v410
    %552 = vmatprep.subr.mxu0 0.0
    %553 = vmatpush2.msra.mxu0 %v409
    %554 = vmatprep.subr.mxu0 0.0
    %555 = vmatpush2.msra.mxu0 %v408
    %556 = vmatprep.subr.mxu0 0.0
    %557 = vmatpush2.msra.mxu0 %v407
    %558 = vmatprep.subr.mxu0 0.0
    %559 = vmatpush2.msra.mxu0 %v406
    %560 = vmatprep.subr.mxu0 0.0
    %561 = vmatpush2.msra.mxu0 %v405
    %562 = vmatprep.mubr.f32.mxu0 %v356
    %563 = vmatmul.mubr.f32.gmra.mxu0 %v355
    %v564 = vpop.f32.mrf.mxu0
    %v565 = vadd.f32 %v495, %v564
    %v566 = vpop.f32.mrf.mxu0
    %567 = vdwg.mxu0
    %vm568 = vcmask 517120
    %569 = vst.msk [vmem:[#allocation7] sm:$0x3] %vm568, %v565
    // Predicated region
    $region30: #{forward.1} parent=1 // pred_check
      _
    $region31: #{forward.1} parent=1 // pred_check_branch
      %571 = sbr.rel (0) target = $region33
    $region32: #{forward.1} parent=1 // pred_region
      %s573 = ssub.s32 32, 32
      %574 = vsyncadd [#allocation4], %s573
      %s576 = sshll.u32 [#allocation7], 4
      %s577 = int_to_ptr.vmem [resolvable:$true] %s576
      %579 = dma.vmem_to_hbm [thread:$0]  %s577, 32, %s5, [#allocation4]
    $region33: #{forward.1} parent=1 // pred_fallthru
      _
    // Predicated region
    $region34: #{forward.1} parent=1 // pred_check
      _
    $region35: #{forward.1} parent=1 // pred_check_branch
      %581 = sbr.rel (0) target = $region37
    $region36: #{forward.1} parent=1 // pred_region
      %582 = dma.done [#allocation4], 32
    $region37: #{forward.1} parent=1 // pred_fallthru
      _
    %583 = vsyncpa [#allocation3], 1
    %584 = vsyncpa [#allocation6], 1
    %585 = vsyncpa [#allocation4], 1

</llo_original>
